<compile_context>
chip_gen: v6e
topology: v6e:2x2x1
jax: 0.10.0
libtpu: 0.0.40
codegen_flags: <defaults>
</compile_context>

<pallas_src>
import jax
import jax.numpy as jnp
from jax.experimental import pallas as pl
from jax.experimental.pallas import tpu as pltpu

_LANE = 128   # TPU vreg lane count (last dim)
_SUB = 8      # f32 sublane count (second-to-last dim)


def _round_up(n, m):
    return ((n + m - 1) // m) * m


def _attention_kernel(x_ref, w1_ref, b1_ref, w2_ref, b2_ref, o_ref):
    """One batch tile: softmax(dim=1)(relu(x@W1+b1) @ W2 + b2)."""
    x = x_ref[...]                                   # (TB, Dp) f32 or bf16
    w1 = w1_ref[...]                                 # (Dp, Dp)
    w2 = w2_ref[...]                                 # (Dp, Dp)

    # Linear1 + ReLU: MXU matmul with f32 accumulation, bias/ReLU in f32 on the VPU.
    h = jnp.dot(x, w1, preferred_element_type=jnp.float32) + b1_ref[...]
    h = jnp.maximum(h, 0.0)

    # Linear2: cast activations to the matmul operand dtype only at the MXU boundary.
    logits = jnp.dot(h.astype(w2.dtype), w2,
                     preferred_element_type=jnp.float32) + b2_ref[...]

    # Numerically stable softmax over dim=1 (features). Padded lanes carry a -1e30
    # bias, so exp() underflows to exactly 0 and they never contribute.
    m = jnp.max(logits, axis=1, keepdims=True)
    e = jnp.exp(logits - m)
    s = jnp.sum(e, axis=1, keepdims=True)
    # Exact division: keeps row sums == 1 to f32 precision (approx vrcp was too coarse).
    o_ref[...] = (e / s).astype(o_ref.dtype)


def attention_mechanism(x, w1, b1, w2, b2, *, block_b=512, matmul_dtype=None):
    """ARTEMIS AttentionMechanism forward.

    x : (B, D)             input
    w1, w2 : (D, D)        weights stored (in_dim, out_dim) (transposed vs. PyTorch)
    b1, b2 : (D,) or (1,D) biases
    block_b : batch tile size (rounded to a multiple of 8)
    matmul_dtype : optional operand dtype for the MXU (e.g. jnp.bfloat16 on v6e/v7x)

    Returns (B, D) in x.dtype.
    """
    B, D = x.shape
    out_dtype = x.dtype
    b1 = jnp.reshape(b1, (1, -1)).astype(jnp.float32)
    b2 = jnp.reshape(b2, (1, -1)).astype(jnp.float32)

    # ---- Lane-dense padding (feature dim -> multiple of 128, batch -> tile multiple) ----
    Dp = _round_up(max(D, _LANE), _LANE)
    b_aligned = _round_up(B, _SUB)
    tb = min(_round_up(block_b, _SUB), b_aligned)
    Bp = _round_up(b_aligned, tb)
    num_tiles = Bp // tb

    xp = jnp.zeros((Bp, Dp), jnp.float32).at[:B, :D].set(x.astype(jnp.float32))
    w1p = jnp.zeros((Dp, Dp), jnp.float32).at[:D, :D].set(w1.astype(jnp.float32))
    w2p = jnp.zeros((Dp, Dp), jnp.float32).at[:D, :D].set(w2.astype(jnp.float32))
    b1p = jnp.zeros((1, Dp), jnp.float32).at[:, :D].set(b1)
    # Padded output features get a huge negative logit -> softmax(dim=1) ignores them.
    b2p = jnp.full((1, Dp), -1e30, jnp.float32).at[:, :D].set(b2)

    if matmul_dtype is not None:
        xp = xp.astype(matmul_dtype)
        w1p = w1p.astype(matmul_dtype)
        w2p = w2p.astype(matmul_dtype)

    out_shape = jax.ShapeDtypeStruct((Bp, Dp), out_dtype)

    # TODO(synk): for very large embed_dim (4k-8k) the full (Dp,Dp) weights no longer fit
    # v7x's 64 MiB VMEM; add K-axis tiling (grid K last, "arbitrary", f32 VMEM accumulator
    # with pl.when init/finalize) instead of keeping both weights fully resident.

    if num_tiles == 1:
        # Single tile: no grid, no pipeline bookkeeping — everything lives in VMEM once.
        out = pl.pallas_call(
            _attention_kernel,
            out_shape=out_shape,
        )(xp, w1p, b1p, w2p, b2p)
    else:
        # Tile over batch; weights/biases use a constant index_map so they are not
        # re-fetched per tile. Batch axis is "parallel" (megacore sharding on v7x).
        out = pl.pallas_call(
            _attention_kernel,
            out_shape=out_shape,
            grid=(num_tiles,),
            in_specs=[
                pl.BlockSpec((tb, Dp), lambda i: (i, 0)),   # x tile
                pl.BlockSpec((Dp, Dp), lambda i: (0, 0)),   # W1 (resident)
                pl.BlockSpec((1, Dp), lambda i: (0, 0)),    # b1 (resident)
                pl.BlockSpec((Dp, Dp), lambda i: (0, 0)),   # W2 (resident)
                pl.BlockSpec((1, Dp), lambda i: (0, 0)),    # b2 (resident)
            ],
            out_specs=pl.BlockSpec((tb, Dp), lambda i: (i, 0)),
            compiler_params=pltpu.CompilerParams(
                dimension_semantics=("parallel",)),
        )(xp, w1p, b1p, w2p, b2p)

    return out[:B, :D]


def reference(x, w1, b1, w2, b2):
    h = jnp.maximum(x @ w1 + jnp.reshape(b1, (1, -1)), 0.0)
    logits = h @ w2 + jnp.reshape(b2, (1, -1))
    return jax.nn.softmax(logits, axis=1)


def reference_quantized(x, w1, b1, w2, b2, dt):
    """Reference with matmul operands rounded to `dt` (mirrors matmul_dtype path)."""
    f32 = jnp.float32
    xq, w1q, w2q = (a.astype(dt).astype(f32) for a in (x, w1, w2))
    h = jnp.maximum(xq @ w1q + jnp.reshape(b1, (1, -1)), 0.0)
    logits = h.astype(dt).astype(f32) @ w2q + jnp.reshape(b2, (1, -1))
    return jax.nn.softmax(logits, axis=1)


if __name__ == "__main__":
    # --- Small shapes consistent with the module: batch=8, embed_dim=32 (f32 path) ---
    B, D = 8, 32
    key = jax.random.PRNGKey(0)
    kx, kw1, kb1, kw2, kb2 = jax.random.split(key, 5)
    scale = 1.0 / jnp.sqrt(jnp.float32(D))

    x = jax.random.normal(kx, (B, D), dtype=jnp.float32)
    w1 = jax.random.uniform(kw1, (D, D), jnp.float32, -scale, scale)
    b1 = jax.random.uniform(kb1, (D,), jnp.float32, -scale, scale)
    w2 = jax.random.uniform(kw2, (D, D), jnp.float32, -scale, scale)
    b2 = jax.random.uniform(kb2, (D,), jnp.float32, -scale, scale)

    out = jax.block_until_ready(attention_mechanism(x, w1, b1, w2, b2))
    ref = reference(x, w1, b1, w2, b2)
    assert out.shape == (B, D)
    assert jnp.allclose(out, ref, atol=2e-3, rtol=2e-3), "mismatch vs f32 reference"
    assert jnp.allclose(jnp.sum(out, axis=1), 1.0, atol=2e-3), "rows must sum to ~1"

    # --- Larger batch: exercises batch tiling ("parallel" grid) + bf16 MXU operands ---
    B2, D2 = 384, 256
    k2 = jax.random.PRNGKey(1)
    kx2, kw12, kb12, kw22, kb22 = jax.random.split(k2, 5)
    s2 = 1.0 / jnp.sqrt(jnp.float32(D2))
    x2 = jax.random.normal(kx2, (B2, D2), dtype=jnp.float32)
    w12 = jax.random.uniform(kw12, (D2, D2), jnp.float32, -s2, s2)
    b12 = jax.random.uniform(kb12, (D2,), jnp.float32, -s2, s2)
    w22 = jax.random.uniform(kw22, (D2, D2), jnp.float32, -s2, s2)
    b22 = jax.random.uniform(kb22, (D2,), jnp.float32, -s2, s2)

    out2 = jax.block_until_ready(
        attention_mechanism(x2, w12, b12, w22, b22,
                            block_b=128, matmul_dtype=jnp.bfloat16))
    ref2 = reference_quantized(x2, w12, b12, w22, b22, jnp.bfloat16)
    assert out2.shape == (B2, D2)
    assert jnp.allclose(out2, ref2, atol=2e-2, rtol=2e-2), "mismatch vs bf16 reference"
    assert jnp.allclose(jnp.sum(out2, axis=1), 1.0, atol=2e-3), "rows must sum to ~1"

    print("KERNEL_OK")
</pallas_src>

<mosaic_0001>
module attributes {stable_mosaic.version = 11 : i64} {
  func.func @_attention_kernel(%arg0: memref<8x128xf32, #tpu.memory_space<vmem>>, %arg1: memref<128x128xf32, #tpu.memory_space<vmem>>, %arg2: memref<1x128xf32, #tpu.memory_space<vmem>>, %arg3: memref<128x128xf32, #tpu.memory_space<vmem>>, %arg4: memref<1x128xf32, #tpu.memory_space<vmem>>, %arg5: memref<8x128xf32, #tpu.memory_space<vmem>>) attributes {dimension_semantics = [], scalar_prefetch = 0 : i64, scratch_operands = 0 : i64, tpu.core_type = #tpu.core_type<tc>} {
    %c0 = arith.constant 0 : index
    %c0_0 = arith.constant 0 : index
    %0 = vector.load %arg0[%c0, %c0_0] : memref<8x128xf32, #tpu.memory_space<vmem>>, vector<8x128xf32>
    %c0_1 = arith.constant 0 : index
    %c0_2 = arith.constant 0 : index
    %1 = vector.load %arg1[%c0_1, %c0_2] : memref<128x128xf32, #tpu.memory_space<vmem>>, vector<128x128xf32>
    %c0_3 = arith.constant 0 : index
    %c0_4 = arith.constant 0 : index
    %2 = vector.load %arg3[%c0_3, %c0_4] : memref<128x128xf32, #tpu.memory_space<vmem>>, vector<128x128xf32>
    %cst = arith.constant dense<0.000000e+00> : vector<8x128xf32>
    %3 = tpu.matmul %0, %1, %cst {dimension_numbers = #tpu.dot_dimension_numbers<[1], [0], [0], [1], [0, 0, 1, 1], [], []>} : vector<8x128xf32>, vector<128x128xf32>, vector<8x128xf32> -> vector<8x128xf32>
    %c0_5 = arith.constant 0 : index
    %c0_6 = arith.constant 0 : index
    %4 = vector.load %arg2[%c0_5, %c0_6] : memref<1x128xf32, #tpu.memory_space<vmem>>, vector<1x128xf32>
    %5 = vector.broadcast %4 : vector<1x128xf32> to vector<8x128xf32>
    %6 = arith.addf %3, %5 : vector<8x128xf32>
    %cst_7 = arith.constant 0.000000e+00 : f32
    %7 = vector.broadcast %cst_7 : f32 to vector<8x128xf32>
    %8 = arith.maximumf %6, %7 : vector<8x128xf32>
    %cst_8 = arith.constant dense<0.000000e+00> : vector<8x128xf32>
    %9 = tpu.matmul %8, %2, %cst_8 {dimension_numbers = #tpu.dot_dimension_numbers<[1], [0], [0], [1], [0, 0, 1, 1], [], []>} : vector<8x128xf32>, vector<128x128xf32>, vector<8x128xf32> -> vector<8x128xf32>
    %c0_9 = arith.constant 0 : index
    %c0_10 = arith.constant 0 : index
    %10 = vector.load %arg4[%c0_9, %c0_10] : memref<1x128xf32, #tpu.memory_space<vmem>>, vector<1x128xf32>
    %11 = vector.broadcast %10 : vector<1x128xf32> to vector<8x128xf32>
    %12 = arith.addf %9, %11 : vector<8x128xf32>
    %cst_11 = arith.constant dense<0xFF800000> : vector<8xf32>
    %13 = vector.multi_reduction <maximumf>, %12, %cst_11 [1] : vector<8x128xf32> to vector<8xf32>
    %14 = vector.shape_cast %13 : vector<8xf32> to vector<8x1xf32>
    %15 = vector.broadcast %14 : vector<8x1xf32> to vector<8x128xf32>
    %16 = arith.subf %12, %15 : vector<8x128xf32>
    %17 = math.exp %16 : vector<8x128xf32>
    %cst_12 = arith.constant dense<0.000000e+00> : vector<8xf32>
    %18 = vector.multi_reduction <add>, %17, %cst_12 [1] : vector<8x128xf32> to vector<8xf32>
    %19 = vector.shape_cast %18 : vector<8xf32> to vector<8x1xf32>
    %20 = vector.broadcast %19 : vector<8x1xf32> to vector<8x128xf32>
    %21 = arith.divf %17, %20 : vector<8x128xf32>
    %c0_13 = arith.constant 0 : index
    %c0_14 = arith.constant 0 : index
    %22 = vector.load %arg5[%c0_13, %c0_14] : memref<8x128xf32, #tpu.memory_space<vmem>>, vector<8x128xf32>
    tpu.vector_store %arg5[%c0_13, %c0_14], %21 {strides = array<i32>} : memref<8x128xf32, #tpu.memory_space<vmem>>, vector<8x128xf32>,
    return
  }
}

</mosaic_0001>

<llo_original>
// kernel: tpu_custom_call.1
$region0: #{tpu_custom_call.1}
  #allocation0 [shape = 'u32[]', space=smem, size = 0x4, offset = 0x4, fixed_abs, tag = 'smem constant byte address 0x4 - core index']
  #allocation1 [shape = 'u32[144,128]{1,0:T(1,128)}', space=vmem, size = 0x12000, scoped, tag = 'internal scratch']
  %s0 = inlined_call_operand.hbm [shape: f32[8,128], index: 0, kind: input, shape index: {}]
  %s1 = inlined_call_operand.hbm [shape: f32[128,128], index: 1, kind: input, shape index: {}]
  %s2 = inlined_call_operand.vmem [shape: f32[1,128], index: 2, kind: input, shape index: {}]
  %s3 = inlined_call_operand.hbm [shape: f32[128,128], index: 3, kind: input, shape index: {}]
  %s4 = inlined_call_operand.vmem [shape: f32[1,128], index: 4, kind: input, shape index: {}]
  %s5 = inlined_call_operand.hbm [shape: f32[8,128], index: 5, kind: output, shape index: {}]
  %s6 = sld [smem:[#allocation0]]
  $region42: #{tpu_custom_call.1} parent=0
    _
  %s8 = ssub.s32 1, %s6
  %s9 = scalar_select 0, %s8, %s6
  $region1: #{tpu_custom_call.1} parent=0
    #allocation2 [shape = 'u8[4096]{0}', space=vmem, size = 0x1000, scoped, tag = 'input window, operand 0, single buffered']
    #allocation3 [shape = 's32[1]{0}', space=sflag, size = 0x4, scoped, tag = 'scoped memory for tpu_custom_call.1']
    #allocation4 [shape = 's32[1]{0}', space=sflag, size = 0x4, scoped, tag = 'scoped memory for tpu_custom_call.1']
    #allocation5 [shape = 'u8[65536]{0}', space=vmem, size = 0x10000, scoped, tag = 'input window, operand 1, single buffered']
    #allocation6 [shape = 's32[1]{0}', space=sflag, size = 0x4, scoped, tag = 'scoped memory for tpu_custom_call.1']
    #allocation7 [shape = 'u8[65536]{0}', space=vmem, size = 0x10000, scoped, tag = 'input window, operand 3, single buffered']
    #allocation8 [shape = 'u8[4096]{0}', space=vmem, size = 0x1000, scoped, tag = 'output window, operand 0, single buffered']
    %10 = vsyncpa [#allocation3], 0
    %11 = vsyncpa [#allocation6], 0
    %12 = vsyncpa [#allocation4], 0
    // Predicated region
    $region2: #{tpu_custom_call.1} parent=1 // pred_check
      _
    $region3: #{tpu_custom_call.1} parent=1 // pred_check_branch
      %14 = sbr.rel (0) target = $region5
    $region4: #{tpu_custom_call.1} parent=1 // pred_region
      %s16 = ssub.s32 128, 128
      %17 = vsyncadd [#allocation3], %s16
      %s19 = sshll.u32 [#allocation2], 4
      %s20 = int_to_ptr.vmem [resolvable:$true] %s19
      %22 = dma.hbm_to_vmem [thread:$0]  %s0, 128, %s20, [#allocation3]
    $region5: #{tpu_custom_call.1} parent=1 // pred_fallthru
      _
    // Predicated region
    $region6: #{tpu_custom_call.1} parent=1 // pred_check
      _
    $region7: #{tpu_custom_call.1} parent=1 // pred_check_branch
      %24 = sbr.rel (0) target = $region9
    $region8: #{tpu_custom_call.1} parent=1 // pred_region
      %s26 = ssub.s32 2048, 2048
      %27 = vsyncadd [#allocation6], %s26
      %s28 = sshll.u32 [#allocation5], 4
      %s29 = int_to_ptr.vmem [resolvable:$true] %s28
      %34 = dma.hbm_to_vmem [thread:$0]  %s1, 2048, %s29, [#allocation6], 128, 128, 8
    $region9: #{tpu_custom_call.1} parent=1 // pred_fallthru
      _
    // Predicated region
    $region10: #{tpu_custom_call.1} parent=1 // pred_check
      _
    $region11: #{tpu_custom_call.1} parent=1 // pred_check_branch
      %36 = sbr.rel (0) target = $region13
    $region12: #{tpu_custom_call.1} parent=1 // pred_region
      _
    $region13: #{tpu_custom_call.1} parent=1 // pred_fallthru
      _
    // Predicated region
    $region14: #{tpu_custom_call.1} parent=1 // pred_check
      _
    $region15: #{tpu_custom_call.1} parent=1 // pred_check_branch
      %38 = sbr.rel (0) target = $region17
    $region16: #{tpu_custom_call.1} parent=1 // pred_region
      %s40 = ssub.s32 2048, 2048
      %41 = vsyncadd [#allocation6], %s40
      %s42 = sshll.u32 [#allocation7], 4
      %s43 = int_to_ptr.vmem [resolvable:$true] %s42
      %48 = dma.hbm_to_vmem [thread:$0]  %s3, 2048, %s43, [#allocation6], 128, 128, 8
    $region17: #{tpu_custom_call.1} parent=1 // pred_fallthru
      _
    // Predicated region
    $region18: #{tpu_custom_call.1} parent=1 // pred_check
      _
    $region19: #{tpu_custom_call.1} parent=1 // pred_check_branch
      %50 = sbr.rel (0) target = $region21
    $region20: #{tpu_custom_call.1} parent=1 // pred_region
      _
    $region21: #{tpu_custom_call.1} parent=1 // pred_fallthru
      _
    // Predicated region
    $region22: #{tpu_custom_call.1} parent=1 // pred_check
      _
    $region23: #{tpu_custom_call.1} parent=1 // pred_check_branch
      %52 = sbr.rel (0) target = $region25
    $region24: #{tpu_custom_call.1} parent=1 // pred_region
      %53 = dma.done [#allocation3], 128
    $region25: #{tpu_custom_call.1} parent=1 // pred_fallthru
      _
    // Predicated region
    $region26: #{tpu_custom_call.1} parent=1 // pred_check
      _
    $region27: #{tpu_custom_call.1} parent=1 // pred_check_branch
      %55 = sbr.rel (0) target = $region29
    $region28: #{tpu_custom_call.1} parent=1 // pred_region
      %56 = dma.done [#allocation6], 2048
    $region29: #{tpu_custom_call.1} parent=1 // pred_fallthru
      _
    // Predicated region
    $region30: #{tpu_custom_call.1} parent=1 // pred_check
      _
    $region31: #{tpu_custom_call.1} parent=1 // pred_check_branch
      %58 = sbr.rel (0) target = $region33
    $region32: #{tpu_custom_call.1} parent=1 // pred_region
      %59 = dma.done [#allocation6], 2048
    $region33: #{tpu_custom_call.1} parent=1 // pred_fallthru
      _
    %v60 = vld [vmem:[#allocation2] sm:$0xff]
    %v61 = vld [vmem:[#allocation5] sm:$0xff]
    %v62 = vld [vmem:[#allocation5 + $0x8] sm:$0xff]
    %v63 = vld [vmem:[#allocation5 + $0x10] sm:$0xff]
    %v64 = vld [vmem:[#allocation5 + $0x18] sm:$0xff]
    %v65 = vld [vmem:[#allocation5 + $0x20] sm:$0xff]
    %v66 = vld [vmem:[#allocation5 + $0x28] sm:$0xff]
    %v67 = vld [vmem:[#allocation5 + $0x30] sm:$0xff]
    %v68 = vld [vmem:[#allocation5 + $0x38] sm:$0xff]
    %v69 = vld [vmem:[#allocation5 + $0x40] sm:$0xff]
    %v70 = vld [vmem:[#allocation5 + $0x48] sm:$0xff]
    %v71 = vld [vmem:[#allocation5 + $0x50] sm:$0xff]
    %v72 = vld [vmem:[#allocation5 + $0x58] sm:$0xff]
    %v73 = vld [vmem:[#allocation5 + $0x60] sm:$0xff]
    %v74 = vld [vmem:[#allocation5 + $0x68] sm:$0xff]
    %v75 = vld [vmem:[#allocation5 + $0x70] sm:$0xff]
    %v76 = vld [vmem:[#allocation5 + $0x78] sm:$0xff]
    %v77 = vld [vmem:[#allocation7] sm:$0xff]
    %v78 = vld [vmem:[#allocation7 + $0x8] sm:$0xff]
    %v79 = vld [vmem:[#allocation7 + $0x10] sm:$0xff]
    %v80 = vld [vmem:[#allocation7 + $0x18] sm:$0xff]
    %v81 = vld [vmem:[#allocation7 + $0x20] sm:$0xff]
    %v82 = vld [vmem:[#allocation7 + $0x28] sm:$0xff]
    %v83 = vld [vmem:[#allocation7 + $0x30] sm:$0xff]
    %v84 = vld [vmem:[#allocation7 + $0x38] sm:$0xff]
    %v85 = vld [vmem:[#allocation7 + $0x40] sm:$0xff]
    %v86 = vld [vmem:[#allocation7 + $0x48] sm:$0xff]
    %v87 = vld [vmem:[#allocation7 + $0x50] sm:$0xff]
    %v88 = vld [vmem:[#allocation7 + $0x58] sm:$0xff]
    %v89 = vld [vmem:[#allocation7 + $0x60] sm:$0xff]
    %v90 = vld [vmem:[#allocation7 + $0x68] sm:$0xff]
    %v91 = vld [vmem:[#allocation7 + $0x70] sm:$0xff]
    %v92 = vld [vmem:[#allocation7 + $0x78] sm:$0xff]
    %v93 = vld [vmem:[%s2] sm:$0x1]
    %v95 = vlaneseq
    %v96 = vshrl.u32 %v95, 7
    %v97 = vsub.s32 0, %v96
    %v98 = vrot.slane %v93, %v97
    %100 = vmatprep.subr.mxu0 0.0
    %101 = vmatpush1.msra.mxu0 %v76
    %102 = vmatprep.subr.mxu0 0.0
    %103 = vmatpush1.msra.mxu0 %v75
    %104 = vmatprep.subr.mxu0 0.0
    %105 = vmatpush1.msra.mxu0 %v74
    %106 = vmatprep.subr.mxu0 0.0
    %107 = vmatpush1.msra.mxu0 %v73
    %108 = vmatprep.subr.mxu0 0.0
    %109 = vmatpush1.msra.mxu0 %v72
    %110 = vmatprep.subr.mxu0 0.0
    %111 = vmatpush1.msra.mxu0 %v71
    %112 = vmatprep.subr.mxu0 0.0
    %113 = vmatpush1.msra.mxu0 %v70
    %114 = vmatprep.subr.mxu0 0.0
    %115 = vmatpush1.msra.mxu0 %v69
    %116 = vmatprep.subr.mxu0 0.0
    %117 = vmatpush1.msra.mxu0 %v68
    %118 = vmatprep.subr.mxu0 0.0
    %119 = vmatpush1.msra.mxu0 %v67
    %120 = vmatprep.subr.mxu0 0.0
    %121 = vmatpush1.msra.mxu0 %v66
    %122 = vmatprep.subr.mxu0 0.0
    %123 = vmatpush1.msra.mxu0 %v65
    %124 = vmatprep.subr.mxu0 0.0
    %125 = vmatpush1.msra.mxu0 %v64
    %126 = vmatprep.subr.mxu0 0.0
    %127 = vmatpush1.msra.mxu0 %v63
    %128 = vmatprep.subr.mxu0 0.0
    %129 = vmatpush1.msra.mxu0 %v62
    %130 = vmatprep.subr.mxu0 0.0
    %131 = vmatpush1.msra.mxu0 %v61
    %132 = vmatprep.subr.mxu0 0.0
    %133 = vmatpush2.msra.mxu0 0.0
    %134 = vmatprep.subr.mxu0 0.0
    %135 = vmatpush2.msra.mxu0 0.0
    %136 = vmatprep.subr.mxu0 0.0
    %137 = vmatpush2.msra.mxu0 0.0
    %138 = vmatprep.subr.mxu0 0.0
    %139 = vmatpush2.msra.mxu0 0.0
    %140 = vmatprep.subr.mxu0 0.0
    %141 = vmatpush2.msra.mxu0 0.0
    %142 = vmatprep.subr.mxu0 0.0
    %143 = vmatpush2.msra.mxu0 0.0
    %144 = vmatprep.subr.mxu0 0.0
    %145 = vmatpush2.msra.mxu0 0.0
    %146 = vmatprep.subr.mxu0 0.0
    %147 = vmatpush2.msra.mxu0 0.0
    %148 = vmatprep.subr.mxu0 0.0
    %149 = vmatpush2.msra.mxu0 0.0
    %150 = vmatprep.subr.mxu0 0.0
    %151 = vmatpush2.msra.mxu0 0.0
    %152 = vmatprep.subr.mxu0 0.0
    %153 = vmatpush2.msra.mxu0 0.0
    %154 = vmatprep.subr.mxu0 0.0
    %155 = vmatpush2.msra.mxu0 0.0
    %156 = vmatprep.subr.mxu0 0.0
    %157 = vmatpush2.msra.mxu0 0.0
    %158 = vmatprep.subr.mxu0 0.0
    %159 = vmatpush2.msra.mxu0 0.0
    %160 = vmatprep.subr.mxu0 0.0
    %161 = vmatpush2.msra.mxu0 0.0
    %162 = vmatprep.subr.mxu0 0.0
    %163 = vmatpush2.msra.mxu0 0.0
    %164 = vmatprep.mubr.f32.mxu0 0.0
    %165 = vmatmul.mubr.f32.gmra.mxu0 %v60
    %v166 = vpop.f32.mrf.mxu0
    %v167 = vadd.f32 %v98, %v166
    %v168 = vpop.f32.mrf.mxu0
    %169 = vdwg.mxu0
    %v170 = vmax.f32 %v167, 0.0
    %v171 = vld [vmem:[%s4] sm:$0x1]
    %v173 = vlaneseq
    %v174 = vshrl.u32 %v173, 7
    %v175 = vsub.s32 0, %v174
    %v176 = vrot.slane %v171, %v175
    %178 = vmatprep.subr.mxu0 0.0
    %179 = vmatpush1.msra.mxu0 %v92
    %180 = vmatprep.subr.mxu0 0.0
    %181 = vmatpush1.msra.mxu0 %v91
    %182 = vmatprep.subr.mxu0 0.0
    %183 = vmatpush1.msra.mxu0 %v90
    %184 = vmatprep.subr.mxu0 0.0
    %185 = vmatpush1.msra.mxu0 %v89
    %186 = vmatprep.subr.mxu0 0.0
    %187 = vmatpush1.msra.mxu0 %v88
    %188 = vmatprep.subr.mxu0 0.0
    %189 = vmatpush1.msra.mxu0 %v87
    %190 = vmatprep.subr.mxu0 0.0
    %191 = vmatpush1.msra.mxu0 %v86
    %192 = vmatprep.subr.mxu0 0.0
    %193 = vmatpush1.msra.mxu0 %v85
    %194 = vmatprep.subr.mxu0 0.0
    %195 = vmatpush1.msra.mxu0 %v84
    %196 = vmatprep.subr.mxu0 0.0
    %197 = vmatpush1.msra.mxu0 %v83
    %198 = vmatprep.subr.mxu0 0.0
    %199 = vmatpush1.msra.mxu0 %v82
    %200 = vmatprep.subr.mxu0 0.0
    %201 = vmatpush1.msra.mxu0 %v81
    %202 = vmatprep.subr.mxu0 0.0
    %203 = vmatpush1.msra.mxu0 %v80
    %204 = vmatprep.subr.mxu0 0.0
    %205 = vmatpush1.msra.mxu0 %v79
    %206 = vmatprep.subr.mxu0 0.0
    %207 = vmatpush1.msra.mxu0 %v78
    %208 = vmatprep.subr.mxu0 0.0
    %209 = vmatpush1.msra.mxu0 %v77
    %210 = vmatprep.subr.mxu0 0.0
    %211 = vmatpush2.msra.mxu0 0.0
    %212 = vmatprep.subr.mxu0 0.0
    %213 = vmatpush2.msra.mxu0 0.0
    %214 = vmatprep.subr.mxu0 0.0
    %215 = vmatpush2.msra.mxu0 0.0
    %216 = vmatprep.subr.mxu0 0.0
    %217 = vmatpush2.msra.mxu0 0.0
    %218 = vmatprep.subr.mxu0 0.0
    %219 = vmatpush2.msra.mxu0 0.0
    %220 = vmatprep.subr.mxu0 0.0
    %221 = vmatpush2.msra.mxu0 0.0
    %222 = vmatprep.subr.mxu0 0.0
    %223 = vmatpush2.msra.mxu0 0.0
    %224 = vmatprep.subr.mxu0 0.0
    %225 = vmatpush2.msra.mxu0 0.0
    %226 = vmatprep.subr.mxu0 0.0
    %227 = vmatpush2.msra.mxu0 0.0
    %228 = vmatprep.subr.mxu0 0.0
    %229 = vmatpush2.msra.mxu0 0.0
    %230 = vmatprep.subr.mxu0 0.0
    %231 = vmatpush2.msra.mxu0 0.0
    %232 = vmatprep.subr.mxu0 0.0
    %233 = vmatpush2.msra.mxu0 0.0
    %234 = vmatprep.subr.mxu0 0.0
    %235 = vmatpush2.msra.mxu0 0.0
    %236 = vmatprep.subr.mxu0 0.0
    %237 = vmatpush2.msra.mxu0 0.0
    %238 = vmatprep.subr.mxu0 0.0
    %239 = vmatpush2.msra.mxu0 0.0
    %240 = vmatprep.subr.mxu0 0.0
    %241 = vmatpush2.msra.mxu0 0.0
    %242 = vmatprep.mubr.f32.mxu0 0.0
    %243 = vmatmul.mubr.f32.gmra.mxu0 %v170
    %v244 = vpop.f32.mrf.mxu0
    %v245 = vadd.f32 %v176, %v244
    %v246 = vpop.f32.mrf.mxu0
    %247 = vdwg.mxu0
    %248 = vmax.xlane.f32.xlu0 %v245
    %v249 = vpop.xlane.xlu0 %248
    %v250 = vsub.f32 %v245, %v249
    %v251 = vmul.f32 %v250, 1.442695
    %v252 = vpow.pop %v251
    %253 = vadd.xlane.f32.xlu0 %v252
    %v254 = vpop.xlane.xlu0 %253
    %v255 = vrcp.pop %v254
    %v256 = vmul.f32 %v252, %v255
    %257 = vst [vmem:[#allocation8] sm:$0xff] %v256
    // Predicated region
    $region34: #{tpu_custom_call.1} parent=1 // pred_check
      _
    $region35: #{tpu_custom_call.1} parent=1 // pred_check_branch
      %259 = sbr.rel (0) target = $region37
    $region36: #{tpu_custom_call.1} parent=1 // pred_region
      %s261 = ssub.s32 128, 128
      %262 = vsyncadd [#allocation4], %s261
      %s264 = sshll.u32 [#allocation8], 4
      %s265 = int_to_ptr.vmem [resolvable:$true] %s264
      %267 = dma.vmem_to_hbm [thread:$0]  %s265, 128, %s5, [#allocation4]
    $region37: #{tpu_custom_call.1} parent=1 // pred_fallthru
      _
    // Predicated region
    $region38: #{tpu_custom_call.1} parent=1 // pred_check
      _
    $region39: #{tpu_custom_call.1} parent=1 // pred_check_branch
      %269 = sbr.rel (0) target = $region41
    $region40: #{tpu_custom_call.1} parent=1 // pred_region
      %270 = dma.done [#allocation4], 128
    $region41: #{tpu_custom_call.1} parent=1 // pred_fallthru
      _
    %271 = vsyncpa [#allocation3], 1
    %272 = vsyncpa [#allocation6], 1
    %273 = vsyncpa [#allocation4], 1

</llo_original>
